<compile_context>
chip_gen: v5e
topology: v5e:2x2
jax: 0.10.0
libtpu: 0.0.40
codegen_flags: <defaults>
</compile_context>

<pallas_src>
import functools

import jax
import jax.numpy as jnp
from jax.experimental import pallas as pl
from jax.experimental.pallas import tpu as pltpu


# ------------------------------ small helpers --------------------------------

def _pick_tile(total, pref, multiple):
    """Largest t <= pref with total % t == 0 and t % multiple == 0, else total."""
    if total <= pref:
        return total
    t = (pref // multiple) * multiple
    while t >= multiple:
        if total % t == 0:
            return t
        t -= multiple
    return total


def _split_channels(x, sizes):
    outs, off = [], 0
    for s in sizes:
        outs.append(x[:, off:off + s])
        off += s
    return outs


# --------------------------- RGB normalization -------------------------------

def _norm_kernel(x_ref, sc_ref, sh_ref, o_ref):
    # fused (x * scale + shift) on a lane-dense (rows, W*3) view
    o_ref[...] = x_ref[...] * sc_ref[...] + sh_ref[...]


def normalize_rgb(x, mean, std, *, row_tile=256):
    # x: (N, H, W, 3) -> lane-dense (N*H, W*3) view; scale/shift precomputed.
    N, H, W, C = x.shape
    rows, cols = N * H, W * C
    scale = jnp.tile(1.0 / std, W).reshape(1, cols)
    shift = jnp.tile(-mean / std, W).reshape(1, cols)
    tr = _pick_tile(rows, row_tile, 8)
    out = pl.pallas_call(
        _norm_kernel,
        out_shape=jax.ShapeDtypeStruct((rows, cols), x.dtype),
        grid=(rows // tr,),
        in_specs=[pl.BlockSpec((tr, cols), lambda r: (r, 0)),
                  pl.BlockSpec((1, cols), lambda r: (0, 0)),
                  pl.BlockSpec((1, cols), lambda r: (0, 0))],
        out_specs=pl.BlockSpec((tr, cols), lambda r: (r, 0)),
        compiler_params=pltpu.CompilerParams(dimension_semantics=("parallel",)),
    )(x.reshape(rows, cols), scale, shift)
    return out.reshape(N, H, W, C)


# ---------------------- conv (3x3 / folded stride-2) kernel ------------------

def _conv_kernel(x_hbm, w_ref, b_ref, *rest, kh, kw, th, wo, cin,
                 use_in, use_relu, fuse_pw):
    if fuse_pw:
        w2_ref, b2_ref, o_ref, buf, sem = rest
    else:
        o_ref, buf, sem = rest

    n = pl.program_id(0)
    t = pl.program_id(1)
    rows = th + kh - 1

    # Manual DMA of the halo row-window of image n (input stays in HBM / ANY).
    cp = pltpu.make_async_copy(x_hbm.at[n, pl.ds(t * th, rows)], buf, sem)
    cp.start()
    cp.wait()

    # Build the (th*wo, kh*kw*cin) patch matrix directly from VMEM (no HBM im2col).
    # NOTE: wo is kept a multiple of 8 so the reshapes below stay layout-trivial.
    pieces = [buf[pl.ds(dy, th), pl.ds(dx, wo), :]
              for dy in range(kh) for dx in range(kw)]
    cols = jnp.concatenate(pieces, axis=-1).reshape(th * wo, kh * kw * cin)

    acc = jnp.dot(cols.astype(jnp.bfloat16), w_ref[...].astype(jnp.bfloat16),
                  preferred_element_type=jnp.float32)
    acc = acc + b_ref[...].astype(jnp.float32)          # (1, Cout) broadcast

    if use_in:
        # One-pass InstanceNorm statistics (biased var, eps=1e-5, as torch IN).
        # TODO(synk): the whole spatial plane must sit in one tile here; a
        # production-size BEV plane needs cross-tile (two-pass) IN statistics.
        m = jnp.mean(acc, axis=0, keepdims=True)
        var = jnp.mean(acc * acc, axis=0, keepdims=True) - m * m
        acc = (acc - m) * jax.lax.rsqrt(var + 1e-5)
    if use_relu:
        acc = jnp.maximum(acc, 0.0)
    if fuse_pw:
        # fused 1x1 conv epilogue (bev_compressor's final Conv2d)
        acc = jnp.dot(acc.astype(jnp.bfloat16), w2_ref[...].astype(jnp.bfloat16),
                      preferred_element_type=jnp.float32)
        acc = acc + b2_ref[...].astype(jnp.float32)

    o_ref[0] = acc.reshape(th, wo, -1).astype(o_ref.dtype)


def _fold_stride2_weight(w3):
    # (3,3,Cin,Cout) -> (2,2,4*Cin,Cout): weights of the equivalent stride-1
    # 2x2 conv over the space-to-depth input (block-channel order: (py, px, c)).
    Cin, Cout = w3.shape[2], w3.shape[3]
    w2 = jnp.zeros((2, 2, 2, 2, Cin, Cout), w3.dtype)
    for by in range(2):
        for bx in range(2):
            for py in range(2):
                for px in range(2):
                    dy = 2 * by + py - 1
                    dx = 2 * bx + px - 1
                    if 0 <= dy < 3 and 0 <= dx < 3:
                        w2 = w2.at[by, bx, py, px].set(w3[dy, dx])
    return w2.reshape(2, 2, 4 * Cin, Cout)


def conv3x3_block(x, w, b, *, stride=1, use_in=False, use_relu=False,
                  pw_w=None, pw_b=None, row_tile=128):
    """3x3 conv (padding=1) with optional fused InstanceNorm2d / ReLU / 1x1 conv.

    stride=2 is folded into the conv (space-to-depth), so it is exactly
    equivalent to the stride-1 conv followed by a [::2, ::2] slice.
    """
    N, H, W, Cin = x.shape
    Cout = w.shape[-1]

    if stride == 1:
        kh = kw = 3
        Ho, Wo = H, W
        cin_eff = Cin
        xp = jnp.pad(x, ((0, 0), (1, 1), (1, 1), (0, 0)))
        wk = w.reshape(kh * kw * cin_eff, Cout)
    elif stride == 2:
        assert H % 2 == 0 and W % 2 == 0
        kh = kw = 2
        Ho, Wo = H // 2, W // 2
        cin_eff = 4 * Cin
        xs = x.reshape(N, Ho, 2, Wo, 2, Cin).transpose(0, 1, 3, 2, 4, 5)
        xs = xs.reshape(N, Ho, Wo, cin_eff)
        xp = jnp.pad(xs, ((0, 0), (1, 0), (1, 0), (0, 0)))
        wk = _fold_stride2_weight(w).reshape(kh * kw * cin_eff, Cout)
    else:
        raise ValueError(f"unsupported stride {stride}")

    fuse_pw = pw_w is not None
    cout_out = pw_w.shape[-1] if fuse_pw else Cout
    th = Ho if use_in else _pick_tile(Ho, row_tile, 8)
    n_t = Ho // th

    kern = functools.partial(_conv_kernel, kh=kh, kw=kw, th=th, wo=Wo,
                             cin=cin_eff, use_in=use_in, use_relu=use_relu,
                             fuse_pw=fuse_pw)

    in_specs = [pl.BlockSpec(memory_space=pl.ANY),                         # activation (HBM)
                pl.BlockSpec((kh * kw * cin_eff, Cout), lambda n, t: (0, 0)),
                pl.BlockSpec((1, Cout), lambda n, t: (0, 0))]
    args = [xp, wk, b.reshape(1, Cout)]
    if fuse_pw:
        in_specs += [pl.BlockSpec((Cout, cout_out), lambda n, t: (0, 0)),
                     pl.BlockSpec((1, cout_out), lambda n, t: (0, 0))]
        args += [pw_w, pw_b.reshape(1, cout_out)]

    out = pl.pallas_call(
        kern,
        out_shape=jax.ShapeDtypeStruct((N, Ho, Wo, cout_out), x.dtype),
        grid=(N, n_t),
        in_specs=in_specs,
        out_specs=pl.BlockSpec((1, th, Wo, cout_out), lambda n, t: (n, t, 0, 0)),
        scratch_shapes=[pltpu.VMEM((th + kh - 1, Wo + kw - 1, cin_eff), x.dtype),
                        pltpu.SemaphoreType.DMA(())],
        compiler_params=pltpu.CompilerParams(
            dimension_semantics=("parallel", "arbitrary"),
            vmem_limit_bytes=32 * 1024 * 1024),
    )(*args)
    return out


# ------------------------ fused decoder-head matmul --------------------------

def _heads_kernel(x_ref, w_ref, b_ref, o_ref):
    # (Cout, Cin) @ (Cin, TM) + b -> lane-dense (Cout, TM) == NCHW output layout
    y = jnp.dot(w_ref[...].astype(jnp.bfloat16), x_ref[0].astype(jnp.bfloat16),
                preferred_element_type=jnp.float32)
    o_ref[0] = (y + b_ref[...].astype(jnp.float32)).astype(o_ref.dtype)


def fused_heads(feat_nhwc, w_cat, b_cat, *, col_tile=512):
    # feat_nhwc: (N, Hf, Wf, Cin); w_cat: (Cout_total, Cin); b_cat: (Cout_total,)
    N, Hf, Wf, Cin = feat_nhwc.shape
    Cout = w_cat.shape[0]
    M = Hf * Wf
    x_t = feat_nhwc.transpose(0, 3, 1, 2).reshape(N, Cin, M)
    tm = _pick_tile(M, col_tile, 128)
    out = pl.pallas_call(
        _heads_kernel,
        out_shape=jax.ShapeDtypeStruct((N, Cout, M), feat_nhwc.dtype),
        grid=(N, M // tm),
        in_specs=[pl.BlockSpec((1, Cin, tm), lambda n, m: (n, 0, m)),
                  pl.BlockSpec((Cout, Cin), lambda n, m: (0, 0)),
                  pl.BlockSpec((Cout, 1), lambda n, m: (0, 0))],
        out_specs=pl.BlockSpec((1, Cout, tm), lambda n, m: (n, 0, m)),
        compiler_params=pltpu.CompilerParams(
            dimension_semantics=("parallel", "parallel")),
    )(x_t, w_cat, b_cat.reshape(Cout, 1))
    return out.reshape(N, Cout, Hf, Wf)            # already NCHW


# --------------------------- max over cameras --------------------------------

def _max_cams_kernel(x_ref, o_ref):
    s = pl.program_id(2)

    @pl.when(s == 0)
    def _():
        o_ref[...] = x_ref[0]

    @pl.when(s > 0)
    def _():
        o_ref[...] = jnp.maximum(o_ref[...], x_ref[0])


def max_over_cams(x, *, p_tile=512):
    # x: (B, S, P, C) -> (B, P, C); running max over S (torch.max(feat_mems, dim=1))
    B, S, P, C = x.shape
    tp = _pick_tile(P, p_tile, 8)
    return pl.pallas_call(
        _max_cams_kernel,
        out_shape=jax.ShapeDtypeStruct((B, P, C), x.dtype),
        grid=(B, P // tp, S),
        in_specs=[pl.BlockSpec((1, 1, tp, C), lambda b, p, s: (b, s, p, 0))],
        out_specs=pl.BlockSpec((1, tp, C), lambda b, p, s: (b, p, 0)),
        compiler_params=pltpu.CompilerParams(
            dimension_semantics=("parallel", "parallel", "arbitrary")),
    )(x)


# ------------------------------- JAX glue -------------------------------------

def scale_intrinsics(K, sx, sy):
    # scale fx,cx by sx and fy,cy by sy (rows 0 and 1 of the 4x4 intrinsics)
    scale = jnp.diag(jnp.array([sx, sy, 1.0, 1.0], jnp.float32))
    return jnp.einsum('ij,njk->nik', scale, K)


def _voxel_grid(Y, Z, X):
    # TODO(synk): vox_util's scene bounds are not provided; fixed synthetic grid.
    xs = jnp.linspace(-0.4, 0.4, X, dtype=jnp.float32)
    ys = jnp.linspace(-0.4, 0.4, Y, dtype=jnp.float32)
    zs = jnp.linspace(1.0, 2.0, Z, dtype=jnp.float32)
    yy, zz, xx = jnp.meshgrid(ys, zs, xs, indexing='ij')    # each (Y, Z, X)
    ones = jnp.ones_like(xx)
    return jnp.stack([xx, yy, zz, ones], axis=-1).reshape(-1, 4)   # (Y*Z*X, 4)


def _bilinear_sample(feat, u, v):
    # feat: (Hf, Wf, C); u, v: (P,) pixel coords; zero padding outside the image.
    Hf, Wf, _ = feat.shape
    u0f, v0f = jnp.floor(u), jnp.floor(v)
    du, dv = (u - u0f)[:, None], (v - v0f)[:, None]
    u0, v0 = u0f.astype(jnp.int32), v0f.astype(jnp.int32)

    def tap(vv, uu):
        valid = ((uu >= 0) & (uu < Wf) & (vv >= 0) & (vv < Hf)).astype(feat.dtype)[:, None]
        vals = feat[jnp.clip(vv, 0, Hf - 1), jnp.clip(uu, 0, Wf - 1)]
        return vals * valid

    return (tap(v0, u0) * (1 - du) * (1 - dv)
            + tap(v0, u0 + 1) * du * (1 - dv)
            + tap(v0 + 1, u0) * (1 - du) * dv
            + tap(v0 + 1, u0 + 1) * du * dv)


def unproject_image_to_mem(feat, featpix_T_ref, Y, Z, X, z_sign):
    # TODO(synk): gather-based bilinear sampling kept in plain JAX (data-dependent
    # gather has no clean blocked-BlockSpec equivalent).
    xyz = _voxel_grid(Y, Z, X)                               # (P, 4)

    def per_cam(feat_n, mat_n):
        pix = xyz @ mat_n.T                                  # (P, 4)
        z = pix[:, 2]
        valid = ((z_sign * z) > 1e-4).astype(feat.dtype)[:, None]
        zc = jnp.where(jnp.abs(z) < 1e-4, 1e-4, z)
        u = pix[:, 0] / zc
        v = pix[:, 1] / zc
        return _bilinear_sample(feat_n, u, v) * valid        # (P, C)

    out = jax.vmap(per_cam)(feat, featpix_T_ref)             # (N, P, C)
    N, _, C = out.shape
    return out.reshape(N, Y, Z, X, C)


# -------------------------------- Segnet_e ------------------------------------

class SegnetE:
    """Pallas/JAX port of Segnet_e with encoder_type='res18', waighting_mode='None',
    feat_direction_mode='None', aggregate_mode='max_pool', rand_flip=False."""

    def __init__(self, Y, Z, X, latent_dim=16, feat2d_dim=8, num_classes=2,
                 num_ids=3, z_sign=1, key=None):
        self.Y, self.Z, self.X = Y, Z, X
        self.latent_dim = latent_dim
        self.feat2d_dim = feat2d_dim
        self.num_classes = num_classes
        self.num_ids = num_ids
        self.z_sign = z_sign
        self.mean = jnp.array([0.485, 0.456, 0.406], jnp.float32)
        self.std = jnp.array([0.229, 0.224, 0.225], jnp.float32)

        key = jax.random.PRNGKey(42) if key is None else key
        ks = iter(jax.random.split(key, 32))

        def w(shape, scale=0.1):
            return jax.random.normal(next(ks), shape, jnp.float32) * scale

        F, L, Zd = feat2d_dim, latent_dim, Z
        self.params = {
            # TODO(synk): Encoder_res18 replaced by a 2-layer stride-2x2 conv stand-in.
            'enc_w1': w((3, 3, 3, F)), 'enc_b1': w((F,)),
            'enc_w2': w((3, 3, F, F)), 'enc_b2': w((F,)),
            # TODO(synk): DecoderImage internals not provided; 1x1-conv heads stand-in.
            'img_center_w': w((F, 2)), 'img_center_b': w((2,)),
            'img_offset_w': w((F, 2)), 'img_offset_b': w((2,)),
            'img_class_w': w((F, num_classes)), 'img_class_b': w((num_classes,)),
            'img_id_w': w((F, num_ids)), 'img_id_b': w((num_ids,)),
            # bev_compressor: Conv2d(F*Z->L,3x3)+InstanceNorm2d+ReLU+Conv2d(L->L,1x1)
            'bev_w1': w((3, 3, F * Zd, L)), 'bev_b1': w((L,)),
            'bev_w2': w((L, L)), 'bev_b2': w((L,)),
            # TODO(synk): DecoderBEV internals not provided; 1x1-conv heads stand-in.
            'bev_center_w': w((L, 1)), 'bev_center_b': w((1,)),
            'bev_offset_w': w((L, 2)), 'bev_offset_b': w((2,)),
            'bev_size_w': w((L, 2)), 'bev_size_b': w((2,)),
            'bev_rot_w': w((L, 1)), 'bev_rot_b': w((1,)),
            'bev_id_w': w((L, num_ids)), 'bev_id_b': w((num_ids,)),
        }
        p = self.params
        # Concatenated head weights: one fused matmul per decoder.
        self.img_head_w = jnp.concatenate(
            [p['img_center_w'].T, p['img_offset_w'].T,
             p['img_class_w'].T, p['img_id_w'].T], axis=0)
        self.img_head_b = jnp.concatenate(
            [p['img_center_b'], p['img_offset_b'],
             p['img_class_b'], p['img_id_b']], axis=0)
        self.img_head_split = (2, 2, num_classes, num_ids)

        self.bev_head_w = jnp.concatenate(
            [p['bev_center_w'].T, p['bev_offset_w'].T, p['bev_size_w'].T,
             p['bev_rot_w'].T, p['bev_id_w'].T], axis=0)
        self.bev_head_b = jnp.concatenate(
            [p['bev_center_b'], p['bev_offset_b'], p['bev_size_b'],
             p['bev_rot_b'], p['bev_id_b']], axis=0)
        self.bev_head_split = (1, 2, 2, 1, num_ids)

    # ---- sub-modules ----

    def _encoder(self, x):
        # stride-2 folded convs == (conv3x3 + ReLU)[::2, ::2] of the old stand-in
        p = self.params
        h = conv3x3_block(x, p['enc_w1'], p['enc_b1'], stride=2, use_relu=True)
        h = conv3x3_block(h, p['enc_w2'], p['enc_b2'], stride=2, use_relu=True)
        return h                                             # (N, H/4, W/4, F)

    def _decoder_image(self, feat):
        out = fused_heads(feat, self.img_head_w, self.img_head_b)   # NCHW
        names = ('img_center', 'img_offset', 'img_class', 'img_id')
        return dict(zip(names, _split_channels(out, self.img_head_split)))

    def _decoder_bev(self, feat_bev):
        out = fused_heads(feat_bev, self.bev_head_w, self.bev_head_b)  # NCHW
        names = ('instance_center', 'instance_offset', 'instance_size',
                 'instance_rot', 'instance_id')
        return dict(zip(names, _split_channels(out, self.bev_head_split)))

    def _feature_weighting(self, out_image_dict, feat, mode='None'):
        # TODO(synk): only waighting_mode='None' (the module default) is implemented.
        assert mode == 'None'
        return feat

    # ---- forward ----

    def __call__(self, rgb_cams, pix_T_cams, cams_T_global, ref_T_global):
        B, S, C, H, W = rgb_cams.shape
        assert C == 3
        F, Y, Z, X = self.feat2d_dim, self.Y, self.Z, self.X
        p = self.params

        # pack sequence dim; move to channels-last for the kernels
        rgb_ = rgb_cams.reshape(B * S, 3, H, W).transpose(0, 2, 3, 1)   # (B*S, H, W, 3)
        pix_T_cams_ = pix_T_cams.reshape(B * S, 4, 4)
        cams_T_global_ = cams_T_global.reshape(B * S, 4, 4)

        global_T_cams_ = jnp.linalg.inv(cams_T_global_)
        ref_T_cams = jnp.matmul(jnp.tile(ref_T_global, (S, 1, 1)), global_T_cams_)
        cams_T_ref_ = jnp.linalg.inv(ref_T_cams)

        rgb_ = normalize_rgb(rgb_, self.mean, self.std)

        feat_cams_ = self._encoder(rgb_)                      # (B*S, Hf, Wf, F)
        _, Hf, Wf, _ = feat_cams_.shape
        sy, sx = Hf / float(H), Wf / float(W)

        out_image_dict = self._decoder_image(feat_cams_)

        featpix_T_cams_ = scale_intrinsics(pix_T_cams_, sx, sy)
        feat_cams_ = self._feature_weighting(out_image_dict, feat_cams_, 'None')
        featpix_T_ref_ = jnp.matmul(featpix_T_cams_, cams_T_ref_)

        feat_mems_ = unproject_image_to_mem(feat_cams_, featpix_T_ref_, Y, Z, X,
                                            self.z_sign)      # (B*S, Y, Z, X, F)
        feat_mems = feat_mems_.reshape(B, S, Y * Z * X, F)

        # aggregate_mode == 'max_pool': running max over cameras (Pallas kernel)
        feat_mem = max_over_cams(feat_mems).reshape(B, Y, Z, X, F)

        # PyTorch: permute(0,1,3,2,4).reshape(B, C*Z, Y, X) -> packed channel = c*Z + z
        feat_bev_ = jnp.transpose(feat_mem, (0, 1, 3, 4, 2)).reshape(B, Y, X, F * Z)

        # bev_compressor: Conv3x3 + InstanceNorm2d + ReLU + Conv1x1, fully fused
        feat_bev = conv3x3_block(feat_bev_, p['bev_w1'], p['bev_b1'],
                                 use_in=True, use_relu=True,
                                 pw_w=p['bev_w2'], pw_b=p['bev_b2'])   # (B, Y, X, L)

        out_bev_dict = self._decoder_bev(feat_bev)
        return {**out_bev_dict, **out_image_dict}


# ---------------------------------- main ---------------------------------------

if __name__ == "__main__":
    key = jax.random.PRNGKey(0)
    B, S, H, W = 1, 2, 32, 32
    Y, Z, X = 8, 2, 8
    feat2d_dim, latent_dim = 8, 16
    num_classes, num_ids = 2, 3

    model = SegnetE(Y, Z, X, latent_dim=latent_dim, feat2d_dim=feat2d_dim,
                    num_classes=num_classes, num_ids=num_ids, z_sign=1,
                    key=jax.random.PRNGKey(42))

    k1, _ = jax.random.split(key)
    rgb_cams = jax.random.uniform(k1, (B, S, 3, H, W), jnp.float32)

    # simple pinhole intrinsics (4x4, like pix_T_cams)
    K = jnp.array([[float(W), 0.0, W / 2.0, 0.0],
                   [0.0, float(H), H / 2.0, 0.0],
                   [0.0, 0.0, 1.0, 0.0],
                   [0.0, 0.0, 0.0, 1.0]], jnp.float32)
    pix_T_cams = jnp.tile(K[None, None], (B, S, 1, 1))

    eye = jnp.eye(4, dtype=jnp.float32)
    cam_shift = jnp.stack([eye.at[0, 3].set(0.1 * s) for s in range(S)], axis=0)
    cams_T_global = jnp.tile(cam_shift[None], (B, 1, 1, 1))
    ref_T_global = jnp.tile(eye[None], (B, 1, 1))

    out = model(rgb_cams, pix_T_cams, cams_T_global, ref_T_global)
    out = jax.block_until_ready(out)

    Hf, Wf = H // 4, W // 4
    assert out['instance_center'].shape == (B, 1, Y, X)
    assert out['instance_offset'].shape == (B, 2, Y, X)
    assert out['instance_id'].shape == (B, num_ids, Y, X)
    assert out['img_center'].shape == (B * S, 2, Hf, Wf)
    assert out['img_class'].shape == (B * S, num_classes, Hf, Wf)
    assert all(bool(jnp.all(jnp.isfinite(v))) for v in out.values())
    print("KERNEL_OK")
</pallas_src>

<mosaic_0001>
module attributes {stable_mosaic.version = 11 : i64} {
  func.func @_norm_kernel(%arg0: i32, %arg1: memref<64x96xf32, #tpu.memory_space<vmem>>, %arg2: memref<1x96xf32, #tpu.memory_space<vmem>>, %arg3: memref<1x96xf32, #tpu.memory_space<vmem>>, %arg4: memref<64x96xf32, #tpu.memory_space<vmem>>) attributes {dimension_semantics = [#tpu.dimension_semantics<parallel>], iteration_bounds = array<i64: 1>, scalar_prefetch = 0 : i64, scratch_operands = 0 : i64, tpu.core_type = #tpu.core_type<tc>, window_params = [{transform_indices = @transform_0, window_bounds = array<i64: 64, 96>}, {pipeline_mode = #tpu.pipeline_mode<synchronous>, transform_indices = @transform_1, window_bounds = array<i64: 1, 96>}, {pipeline_mode = #tpu.pipeline_mode<synchronous>, transform_indices = @transform_2, window_bounds = array<i64: 1, 96>}, {transform_indices = @transform_3, window_bounds = array<i64: 64, 96>}]} {
    %c0 = arith.constant 0 : index
    %c0_0 = arith.constant 0 : index
    %0 = vector.load %arg1[%c0, %c0_0] : memref<64x96xf32, #tpu.memory_space<vmem>>, vector<64x96xf32>
    %c0_1 = arith.constant 0 : index
    %c0_2 = arith.constant 0 : index
    %1 = vector.load %arg2[%c0_1, %c0_2] : memref<1x96xf32, #tpu.memory_space<vmem>>, vector<1x96xf32>
    %2 = vector.broadcast %1 : vector<1x96xf32> to vector<64x96xf32>
    %3 = arith.mulf %0, %2 : vector<64x96xf32>
    %c0_3 = arith.constant 0 : index
    %c0_4 = arith.constant 0 : index
    %4 = vector.load %arg3[%c0_3, %c0_4] : memref<1x96xf32, #tpu.memory_space<vmem>>, vector<1x96xf32>
    %5 = vector.broadcast %4 : vector<1x96xf32> to vector<64x96xf32>
    %6 = arith.addf %3, %5 : vector<64x96xf32>
    %c0_5 = arith.constant 0 : index
    %c0_6 = arith.constant 0 : index
    %7 = vector.load %arg4[%c0_5, %c0_6] : memref<64x96xf32, #tpu.memory_space<vmem>>, vector<64x96xf32>
    tpu.vector_store %arg4[%c0_5, %c0_6], %6 {strides = array<i32>} : memref<64x96xf32, #tpu.memory_space<vmem>>, vector<64x96xf32>,
    return
  }
  func.func @transform_0(%arg0: i32) -> (i32, i32) {
    %c0_i32 = arith.constant 0 : i32
    %c0_i32_0 = arith.constant 0 : i32
    return %arg0, %c0_i32 : i32, i32
  }
  func.func @transform_1(%arg0: i32) -> (i32, i32) {
    %c0_i32 = arith.constant 0 : i32
    %c0_i32_0 = arith.constant 0 : i32
    %c0_i32_1 = arith.constant 0 : i32
    return %c0_i32, %c0_i32_0 : i32, i32
  }
  func.func @transform_2(%arg0: i32) -> (i32, i32) {
    %c0_i32 = arith.constant 0 : i32
    %c0_i32_0 = arith.constant 0 : i32
    %c0_i32_1 = arith.constant 0 : i32
    return %c0_i32, %c0_i32_0 : i32, i32
  }
  func.func @transform_3(%arg0: i32) -> (i32, i32) {
    %c0_i32 = arith.constant 0 : i32
    %c0_i32_0 = arith.constant 0 : i32
    return %arg0, %c0_i32 : i32, i32
  }
}

</mosaic_0001>

<llo_original>
// kernel: tpu_custom_call.1
$region0: #{tpu_custom_call.1}
  #allocation0 [shape = 'u32[]', space=smem, size = 0x4, offset = 0x4, fixed_abs, tag = 'smem constant byte address 0x4 - core index']
  #allocation1 [shape = 'u32[72,128]{1,0:T(1,128)}', space=vmem, size = 0x9000, scoped, tag = 'internal scratch']
  %s0 = inlined_call_operand.hbm [shape: f32[64,96], index: 0, kind: input, shape index: {}]
  %s1 = inlined_call_operand.hbm [shape: f32[1,96], index: 1, kind: input, shape index: {}]
  %s2 = inlined_call_operand.vmem [shape: f32[1,96], index: 2, kind: input, shape index: {}]
  %s3 = inlined_call_operand.hbm [shape: f32[64,96], index: 3, kind: output, shape index: {}]
  %s4 = sld [smem:[#allocation0]]
  $region30: #{tpu_custom_call.1} parent=0
    _
  %s6 = ssub.s32 1, %s4
  %s7 = scalar_select 0, %s6, %s4
  $region1: #{tpu_custom_call.1} parent=0
    #allocation2 [shape = 'u8[32768]{0}', space=vmem, size = 0x8000, scoped, tag = 'input window, operand 0, single buffered']
    #allocation3 [shape = 's32[1]{0}', space=sflag, size = 0x4, scoped, tag = 'scoped memory for tpu_custom_call.1']
    #allocation4 [shape = 's32[1]{0}', space=sflag, size = 0x4, scoped, tag = 'scoped memory for tpu_custom_call.1']
    #allocation5 [shape = 'u8[512]{0}', space=vmem, size = 0x400, scoped, tag = 'input window, operand 1, single buffered']
    #allocation6 [shape = 's32[1]{0}', space=sflag, size = 0x4, scoped, tag = 'scoped memory for tpu_custom_call.1']
    #allocation7 [shape = 'u8[32768]{0}', space=vmem, size = 0x8000, scoped, tag = 'output window, operand 0, single buffered']
    %8 = vsyncpa [#allocation3], 0
    %9 = vsyncpa [#allocation6], 0
    %10 = vsyncpa [#allocation4], 0
    // Predicated region
    $region2: #{tpu_custom_call.1} parent=1 // pred_check
      _
    $region3: #{tpu_custom_call.1} parent=1 // pred_check_branch
      %12 = sbr.rel (0) target = $region5
    $region4: #{tpu_custom_call.1} parent=1 // pred_region
      %14 = vsyncadd [#allocation3], 0
      %s15 = sshll.u32 %s0, 4
      %s16 = int_to_ptr.hbm [resolvable:$true] %s15
      %s17 = sshll.u32 [#allocation2], 4
      %s18 = int_to_ptr.vmem [resolvable:$true] %s17
      %23 = dma.hbm_to_vmem [thread:$0]  %s16, 1024, %s18, [#allocation3], 128, 128, 8
    $region5: #{tpu_custom_call.1} parent=1 // pred_fallthru
      _
    // Predicated region
    $region6: #{tpu_custom_call.1} parent=1 // pred_check
      _
    $region7: #{tpu_custom_call.1} parent=1 // pred_check_branch
      %25 = sbr.rel (0) target = $region9
    $region8: #{tpu_custom_call.1} parent=1 // pred_region
      %27 = vsyncadd [#allocation6], 0
      %s29 = sshll.u32 %s1, 4
      %s30 = int_to_ptr.hbm [resolvable:$true] %s29
      %s31 = sshll.u32 [#allocation5], 4
      %s32 = int_to_ptr.vmem [resolvable:$true] %s31
      %34 = dma.hbm_to_vmem [thread:$0]  %s30, 16, %s32, [#allocation6]
    $region9: #{tpu_custom_call.1} parent=1 // pred_fallthru
      _
    // Predicated region
    $region10: #{tpu_custom_call.1} parent=1 // pred_check
      _
    $region11: #{tpu_custom_call.1} parent=1 // pred_check_branch
      %36 = sbr.rel (0) target = $region13
    $region12: #{tpu_custom_call.1} parent=1 // pred_region
      _
    $region13: #{tpu_custom_call.1} parent=1 // pred_fallthru
      _
    // Predicated region
    $region14: #{tpu_custom_call.1} parent=1 // pred_check
      _
    $region15: #{tpu_custom_call.1} parent=1 // pred_check_branch
      %38 = sbr.rel (0) target = $region17
    $region16: #{tpu_custom_call.1} parent=1 // pred_region
      %40 = dma.done [#allocation3], 1024
    $region17: #{tpu_custom_call.1} parent=1 // pred_fallthru
      _
    // Predicated region
    $region18: #{tpu_custom_call.1} parent=1 // pred_check
      _
    $region19: #{tpu_custom_call.1} parent=1 // pred_check_branch
      %42 = sbr.rel (0) target = $region21
    $region20: #{tpu_custom_call.1} parent=1 // pred_region
      %44 = dma.done [#allocation6], 16
    $region21: #{tpu_custom_call.1} parent=1 // pred_fallthru
      _
    %v45 = vld [vmem:[#allocation2] sm:$0xff]
    %v46 = vld [vmem:[#allocation2 + $0x8] sm:$0xff]
    %v47 = vld [vmem:[#allocation2 + $0x10] sm:$0xff]
    %v48 = vld [vmem:[#allocation2 + $0x18] sm:$0xff]
    %v49 = vld [vmem:[#allocation2 + $0x20] sm:$0xff]
    %v50 = vld [vmem:[#allocation2 + $0x28] sm:$0xff]
    %v51 = vld [vmem:[#allocation2 + $0x30] sm:$0xff]
    %v52 = vld [vmem:[#allocation2 + $0x38] sm:$0xff]
    %v53 = vld [vmem:[#allocation5] sm:$0x1]
    %v55 = vperm.slane %v53, 0
    %v57 = vmul.f32 %v45, %v55
    %v58 = vmul.f32 %v46, %v55
    %v59 = vmul.f32 %v47, %v55
    %v60 = vmul.f32 %v48, %v55
    %v61 = vmul.f32 %v49, %v55
    %v62 = vmul.f32 %v50, %v55
    %v63 = vmul.f32 %v51, %v55
    %v64 = vmul.f32 %v52, %v55
    %v65 = vld [vmem:[%s2] sm:$0x1]
    %v67 = vperm.slane %v65, 0
    %v69 = vadd.f32 %v57, %v67
    %v70 = vadd.f32 %v58, %v67
    %v71 = vadd.f32 %v59, %v67
    %v72 = vadd.f32 %v60, %v67
    %v73 = vadd.f32 %v61, %v67
    %v74 = vadd.f32 %v62, %v67
    %v75 = vadd.f32 %v63, %v67
    %v76 = vadd.f32 %v64, %v67
    %vm77 = vcmask 785408
    %78 = vst.msk [vmem:[#allocation7] sm:$0xff] %vm77, %v69
    %79 = vst.msk [vmem:[#allocation7 + $0x8] sm:$0xff] %vm77, %v70
    %80 = vst.msk [vmem:[#allocation7 + $0x10] sm:$0xff] %vm77, %v71
    %81 = vst.msk [vmem:[#allocation7 + $0x18] sm:$0xff] %vm77, %v72
    %82 = vst.msk [vmem:[#allocation7 + $0x20] sm:$0xff] %vm77, %v73
    %83 = vst.msk [vmem:[#allocation7 + $0x28] sm:$0xff] %vm77, %v74
    %84 = vst.msk [vmem:[#allocation7 + $0x30] sm:$0xff] %vm77, %v75
    %85 = vst.msk [vmem:[#allocation7 + $0x38] sm:$0xff] %vm77, %v76
    // Predicated region
    $region22: #{tpu_custom_call.1} parent=1 // pred_check
      _
    $region23: #{tpu_custom_call.1} parent=1 // pred_check_branch
      %87 = sbr.rel (0) target = $region25
    $region24: #{tpu_custom_call.1} parent=1 // pred_region
      %89 = vsyncadd [#allocation4], 0
      %s90 = sshll.u32 [#allocation7], 4
      %s91 = int_to_ptr.vmem [resolvable:$true] %s90
      %s92 = sshll.u32 %s3, 4
      %s93 = int_to_ptr.hbm [resolvable:$true] %s92
      %98 = dma.vmem_to_hbm [thread:$0]  %s91, 1024, %s93, [#allocation4], 128, 128, 8
    $region25: #{tpu_custom_call.1} parent=1 // pred_fallthru
      _
    // Predicated region
    $region26: #{tpu_custom_call.1} parent=1 // pred_check
      _
    $region27: #{tpu_custom_call.1} parent=1 // pred_check_branch
      %100 = sbr.rel (0) target = $region29
    $region28: #{tpu_custom_call.1} parent=1 // pred_region
      %102 = dma.done [#allocation4], 1024
    $region29: #{tpu_custom_call.1} parent=1 // pred_fallthru
      _
    %103 = vsyncpa [#allocation3], 1
    %104 = vsyncpa [#allocation6], 1
    %105 = vsyncpa [#allocation4], 1

</llo_original>
